<compile_context>
chip_gen: v6e
topology: v6e:2x2x1
jax: 0.10.0
libtpu: 0.0.40
codegen_flags: <defaults>
</compile_context>

<pallas_src>
import jax
import jax.numpy as jnp
from jax.experimental import pallas as pl
from jax.experimental.pallas import tpu as pltpu


def _make_sigmoid_mul_kernel(c_block, sublane_align):
    def kernel(gate_ref, x_ref, o_ref):
        # gate_ref: (C, 1), original gate dtype, resident in VMEM across steps.
        # x_ref/o_ref: (c_block, HW) tile for this grid step.
        start = pl.multiple_of(pl.program_id(0) * c_block, sublane_align)
        gate = jax.nn.sigmoid(
            gate_ref[pl.ds(start, c_block), :].astype(jnp.float32)
        )
        # Multiply in the activation dtype (no-op casts for f32; halves vreg
        # footprint for bf16 activations on v6e/v7x).
        o_ref[...] = (gate.astype(x_ref.dtype) * x_ref[...]).astype(o_ref.dtype)

    return kernel


def _pick_c_block(C, HW, itemsize, align, requested):
    """Pick a channel block: divides C, sublane-aligned, fits a VMEM budget.

    Budget rationale: the pipeline holds ~2 buffers each for the input tile and
    the (aliased) output tile -> ~4x block bytes of VMEM plus the tiny resident
    gate.  3 MiB/block => ~12 MiB pipelined, comfortably under v5e's 16 MiB
    default scoped-VMEM limit, v6e's 32 MiB default, and v7x's 64 MiB physical.
    """
    budget = 3 << 20

    def ok(blk):
        return C % blk == 0 and blk % align == 0 and blk * HW * itemsize <= budget

    if requested is not None and ok(requested):
        return requested
    candidates = [b for b in range(align, C + 1, align) if ok(b)]
    if not candidates:
        # TODO(synk): pad/mask path for C not divisible by the sublane tile at
        # very large HW; a full-extent block is legal (bypasses the (8,128)
        # rule) but may exceed the VMEM budget.
        return C
    # Small slabs: prefer the largest block giving exactly 2 grid steps (one
    # per v7x TensorCore, minimal per-step overhead, still overlaps in/out
    # DMA).  Otherwise prefer an even grid >= 2 steps, otherwise the largest.
    two_step = [b for b in candidates if C // b == 2]
    if two_step:
        return max(two_step)
    even = [b for b in candidates if (C // b) % 2 == 0 and (C // b) >= 2]
    pool = even if even else candidates
    return max(pool)


def sigmoid_mul(x219, x215, *, c_block=240, donate_activations=True):
    """Computes sigmoid(x219) * x215 with NCHW broadcasting semantics.

    x219: (N, C, 1, 1) gate logits, x215: (N, C, H, W) activations.
    Returns (N, C, H, W).

    WARNING: with donate_activations=True (default), x215's HBM buffer is
    aliased to the output and must not be read after this call.
    """
    N, C, H, W = x215.shape
    assert x219.shape == (N, C, 1, 1)
    assert N == 1, "kernel written for N==1 (as in the reference module)"
    HW = H * W

    x_itemsize = jnp.dtype(x215.dtype).itemsize
    gate_itemsize = jnp.dtype(x219.dtype).itemsize
    # dtype-aware sublane alignment: 32-bit sublane tile of 8 rows => packed
    # rows per tile = 32 // itemsize (8 for f32, 16 for bf16, 32 for int8/fp8).
    align = max(32 // x_itemsize, 32 // gate_itemsize)

    c_block = _pick_c_block(C, HW, x_itemsize, align, c_block)
    assert C % c_block == 0 and (c_block % align == 0 or c_block == C), (
        "illegal channel block", c_block, C, align)
    n_steps = C // c_block

    # Keep the gate in its ORIGINAL dtype; the sigmoid is done in f32 in-kernel.
    gate2d = x219.reshape(C, 1)
    x2d = x215.reshape(C, HW)

    gate_spec = pl.BlockSpec((C, 1), lambda i: (0, 0))  # resident for all steps
    if n_steps >= 3:
        # Deeper buffering only matters once steps get short relative to the
        # ~0.35 us per-step overhead (larger-HW variants).
        x_spec = pl.BlockSpec((c_block, HW), lambda i: (i, 0),
                              pipeline_mode=pl.Buffered(3))
    else:
        x_spec = pl.BlockSpec((c_block, HW), lambda i: (i, 0))
    out_spec = pl.BlockSpec((c_block, HW), lambda i: (i, 0))

    out2d = pl.pallas_call(
        _make_sigmoid_mul_kernel(c_block, align),
        out_shape=jax.ShapeDtypeStruct((C, HW), x215.dtype),
        grid_spec=pl.GridSpec(
            grid=(n_steps,),
            in_specs=[gate_spec, x_spec],
            out_specs=out_spec,
        ),
        # In-place over x's HBM buffer (purely elementwise) when donated.
        input_output_aliases={1: 0} if donate_activations else {},
        compiler_params=pltpu.CompilerParams(
            dimension_semantics=("parallel",),
        ),
    )(gate2d, x2d)

    return out2d.reshape(N, C, H, W)


if __name__ == "__main__":
    key = jax.random.PRNGKey(0)
    k1, k2 = jax.random.split(key)

    # Shapes from the PyTorch module: x215 (1,480,28,28), x219 (1,480,1,1)
    x215 = jax.random.normal(k1, (1, 480, 28, 28), dtype=jnp.float32)
    x219 = jax.random.normal(k2, (1, 480, 1, 1), dtype=jnp.float32)

    # Plain-JAX reference (computed BEFORE the kernel call -- the kernel
    # donates x215's buffer by default).
    ref = jax.nn.sigmoid(x219) * x215

    out = sigmoid_mul(x219, x215)
    out = jax.block_until_ready(out)

    assert out.shape == (1, 480, 28, 28)
    assert jnp.allclose(out, ref, atol=1e-5, rtol=1e-5)

    print("KERNEL_OK")
</pallas_src>

<mosaic_0001>
module attributes {stable_mosaic.version = 11 : i64} {
  func.func @kernel(%arg0: i32, %arg1: memref<480x1xf32, #tpu.memory_space<vmem>>, %arg2: memref<240x784xf32, #tpu.memory_space<vmem>>, %arg3: memref<240x784xf32, #tpu.memory_space<vmem>>) attributes {dimension_semantics = [#tpu.dimension_semantics<parallel>], iteration_bounds = array<i64: 2>, scalar_prefetch = 0 : i64, scratch_operands = 0 : i64, tpu.core_type = #tpu.core_type<tc>, window_params = [{pipeline_mode = #tpu.pipeline_mode<synchronous>, transform_indices = @transform_0, window_bounds = array<i64: 480, 1>}, {transform_indices = @transform_1, window_bounds = array<i64: 240, 784>}, {transform_indices = @transform_2, window_bounds = array<i64: 240, 784>}]} {
    %c240_i32 = arith.constant 240 : i32
    %0 = arith.muli %arg0, %c240_i32 : i32
    %1 = tpu.assume_multiple %0, 8 : i32
    %2 = arith.index_cast %1 : i32 to index
    %c0 = arith.constant 0 : index
    %3 = vector.load %arg1[%2, %c0] : memref<480x1xf32, #tpu.memory_space<vmem>>, vector<240x1xf32>
    %4 = arith.negf %3 : vector<240x1xf32>
    %5 = math.exp %4 : vector<240x1xf32>
    %cst = arith.constant 1.000000e+00 : f32
    %6 = vector.broadcast %cst : f32 to vector<240x1xf32>
    %7 = arith.addf %6, %5 : vector<240x1xf32>
    %8 = arith.divf %6, %7 : vector<240x1xf32>
    %c0_0 = arith.constant 0 : index
    %c0_1 = arith.constant 0 : index
    %9 = vector.load %arg2[%c0_0, %c0_1] : memref<240x784xf32, #tpu.memory_space<vmem>>, vector<240x784xf32>
    %10 = vector.broadcast %8 : vector<240x1xf32> to vector<240x784xf32>
    %11 = arith.mulf %10, %9 : vector<240x784xf32>
    %c0_2 = arith.constant 0 : index
    %c0_3 = arith.constant 0 : index
    %12 = vector.load %arg3[%c0_2, %c0_3] : memref<240x784xf32, #tpu.memory_space<vmem>>, vector<240x784xf32>
    tpu.vector_store %arg3[%c0_2, %c0_3], %11 {strides = array<i32>} : memref<240x784xf32, #tpu.memory_space<vmem>>, vector<240x784xf32>,
    return
  }
  func.func @transform_0(%arg0: i32) -> (i32, i32) {
    %c0_i32 = arith.constant 0 : i32
    %c0_i32_0 = arith.constant 0 : i32
    %c0_i32_1 = arith.constant 0 : i32
    return %c0_i32, %c0_i32_0 : i32, i32
  }
  func.func @transform_1(%arg0: i32) -> (i32, i32) {
    %c0_i32 = arith.constant 0 : i32
    %c0_i32_0 = arith.constant 0 : i32
    return %arg0, %c0_i32 : i32, i32
  }
  func.func @transform_2(%arg0: i32) -> (i32, i32) {
    %c0_i32 = arith.constant 0 : i32
    %c0_i32_0 = arith.constant 0 : i32
    return %arg0, %c0_i32 : i32, i32
  }
}

</mosaic_0001>

<llo_original>
// kernel: tpu_custom_call.1
$region0: #{tpu_custom_call.1}
  #allocation0 [shape = 'u32[]', space=smem, size = 0x4, offset = 0x4, fixed_abs, tag = 'smem constant byte address 0x4 - core index']
  #allocation1 [shape = 'u32[144,128]{1,0:T(1,128)}', space=vmem, size = 0x12000, scoped, tag = 'internal scratch']
  %s0 = inlined_call_operand.vmem [shape: f32[480,1], index: 0, kind: input, shape index: {}]
  %s1 = inlined_call_operand.vmem [shape: f32[480,784], index: 1, kind: input, shape index: {}, may-alias: {1,2}]
  %s2 = inlined_call_operand.vmem [shape: f32[480,784], index: 2, kind: output, shape index: {}, may-alias: {1,2}]
  %s3 = sld [smem:[#allocation0]]
  $region41: #{tpu_custom_call.1} parent=0
    _
  %s5 = ssub.s32 1, %s3
  %s6 = scalar_select 0, %s5, %s3
  loop: start=0, step=1, limit=4
  $region2: #{tpu_custom_call.1} parent=0 // loop_pre_header
    _
  $region3: #{tpu_custom_call.1} parent=0 // loop_header
    %s8 = sphi 0, %s12
    %p9 = scmp.ge.s32.totalorder %s8, 4
    %s16 = sphi 0, %s16
    %s18 = sphi 0, %s16
    %s19 = sphi 0, %s18
    %s33 = sphi 0, %s19
    %s39 = sphi 0, %s41
    %s42 = sphi 0, %s39
    %s43 = sphi 0, %s42
    %s59 = sphi 0, %s43
    %s65 = sphi 0, %s67
    %s68 = sphi 0, %s65
    %s69 = sphi 0, %s68
    %s85 = sphi 0, %s69
  $region4: #{tpu_custom_call.1} parent=0 // loop_header_branch
    %11 = sbr.rel (%p9) target = $region8
  $region5: #{tpu_custom_call.1} parent=0 // loop_body
    %s13 = ssub.s32 %s8, 1
    %s14 = ssub.s32 %s8, 2
    %s15 = sadd.s32 %s8, 1
    %s17 = sadd.s32 %s16, 1
    %p20 = scmp.eq.s32.totalorder %s8, 1
    %p21 = scmp.ne.s32.totalorder %s16, %s18
    %p22 = scmp.eq.s32.totalorder %s8, 0
    %p23 = por %p21, %p22
    %p24 = scmp.ne.s32.totalorder %s16, %s18
    %p25 = scmp.eq.s32.totalorder %s13, 1
    %p26 = por %p24, %p25
    %p27 = scmp.ne.s32.totalorder %s18, %s19
    %p28 = scmp.eq.s32.totalorder %s13, 0
    %p29 = por %p27, %p28
    %p30 = scmp.ne.s32.totalorder %s18, %s19
    %p31 = scmp.eq.s32.totalorder %s14, 1
    %p32 = por %p30, %p31
    %p34 = scmp.ne.s32.totalorder %s19, %s33
    %p35 = scmp.eq.s32.totalorder %s14, 0
    %p36 = por %p34, %p35
    %s37 = ssub.s32 %s8, %s15
    %p38 = scmp.eq.s32.totalorder %s37, 0
    %s40 = sadd.s32 %s39, 1
    %s41 = scalar_select %p38, %s39, %s40
    %p44 = pneg %p38
    %p45 = scmp.eq.s32.totalorder %s8, 1
    %p46 = por %p44, %p45
    %p47 = scmp.ne.s32.totalorder %s39, %s42
    %p48 = scmp.eq.s32.totalorder %s8, 0
    %p49 = por %p47, %p48
    %p50 = scmp.ne.s32.totalorder %s39, %s42
    %p51 = scmp.eq.s32.totalorder %s13, 1
    %p52 = por %p50, %p51
    %p53 = scmp.ne.s32.totalorder %s42, %s43
    %p54 = scmp.eq.s32.totalorder %s13, 0
    %p55 = por %p53, %p54
    %p56 = scmp.ne.s32.totalorder %s42, %s43
    %p57 = scmp.eq.s32.totalorder %s14, 1
    %p58 = por %p56, %p57
    %p60 = scmp.ne.s32.totalorder %s43, %s59
    %p61 = scmp.eq.s32.totalorder %s14, 0
    %p62 = por %p60, %p61
    %s63 = ssub.s32 %s8, %s15
    %p64 = scmp.eq.s32.totalorder %s63, 0
    %s66 = sadd.s32 %s65, 1
    %s67 = scalar_select %p64, %s65, %s66
    %p70 = pneg %p64
    %p71 = scmp.eq.s32.totalorder %s8, 1
    %p72 = por %p70, %p71
    %p73 = scmp.ne.s32.totalorder %s65, %s68
    %p74 = scmp.eq.s32.totalorder %s8, 0
    %p75 = por %p73, %p74
    %p76 = scmp.ne.s32.totalorder %s65, %s68
    %p77 = scmp.eq.s32.totalorder %s13, 1
    %p78 = por %p76, %p77
    %p79 = scmp.ne.s32.totalorder %s68, %s69
    %p80 = scmp.eq.s32.totalorder %s13, 0
    %p81 = por %p79, %p80
    %p82 = scmp.ne.s32.totalorder %s68, %s69
    %p83 = scmp.eq.s32.totalorder %s14, 1
    %p84 = por %p82, %p83
    %p86 = scmp.ne.s32.totalorder %s69, %s85
    %p87 = scmp.eq.s32.totalorder %s14, 0
    %p88 = por %p86, %p87
    %p89 = scmp.le.s32.totalorder 1, %s8
    %p90 = scmp.lt.s32.totalorder %s8, 3
    %p91 = pnand %p89, %p90
    %p92 = pneg %p91
    // Predicated region
    $region9: #{tpu_custom_call.1} parent=5 // pred_check
      _
    $region10: #{tpu_custom_call.1} parent=5 // pred_check_branch
      %94 = sbr.rel (%p91) target = $region12
    $region11: #{tpu_custom_call.1} parent=5 // pred_region
      %s95 = ssub.s32 %s8, 1
      // Predicated region
      $region13: #{tpu_custom_call.1} parent=11 // pred_check
        %p96 = pneg %p29
      $region14: #{tpu_custom_call.1} parent=11 // pred_check_branch
        %98 = sbr.rel (%p96) target = $region16
      $region15: #{tpu_custom_call.1} parent=11 // pred_region
        _
      $region16: #{tpu_custom_call.1} parent=11 // pred_fallthru
        _
    $region12: #{tpu_custom_call.1} parent=5 // pred_fallthru
      _
    %p99 = scmp.lt.s32.totalorder %s8, 2
    // Predicated region
    $region17: #{tpu_custom_call.1} parent=5 // pred_check
      %p100 = pneg %p99
    $region18: #{tpu_custom_call.1} parent=5 // pred_check_branch
      %102 = sbr.rel (%p100) target = $region20
    $region19: #{tpu_custom_call.1} parent=5 // pred_region
      // Predicated region
      $region21: #{tpu_custom_call.1} parent=19 // pred_check
        %p103 = pneg %p49
      $region22: #{tpu_custom_call.1} parent=19 // pred_check_branch
        %105 = sbr.rel (%p103) target = $region24
      $region23: #{tpu_custom_call.1} parent=19 // pred_region
        %s106 = smul.u32 30, %s8
        %p107 = scmp.lt.s32.totalorder %s106, 59
        %s108 = scalar_select %p107, %s106, 59
        %s109 = smul.addr %s108, 7
        %s110 = smul.addr %s109, 8
        %s111 = scalar_lea.vmem %s1, %s110
        %s112 = smul.u32 30, %s8
      $region24: #{tpu_custom_call.1} parent=19 // pred_fallthru
        _
    $region20: #{tpu_custom_call.1} parent=5 // pred_fallthru
      _
    %p113 = scmp.le.s32.totalorder 1, %s8
    %p114 = scmp.lt.s32.totalorder %s8, 3
    %p115 = pnand %p113, %p114
    %p116 = pneg %p115
    // Predicated region
    $region25: #{tpu_custom_call.1} parent=5 // pred_check
      _
    $region26: #{tpu_custom_call.1} parent=5 // pred_check_branch
      %118 = sbr.rel (%p115) target = $region28
    $region27: #{tpu_custom_call.1} parent=5 // pred_region
      %s119 = ssub.s32 %s8, 1
      %p120 = pneg %p29
      %p121 = pneg %p26
      %s122 = smul.u32 30, %s13
      %p123 = scmp.lt.s32.totalorder %s122, 59
      %s124 = scalar_select %p123, %s122, 59
      %s125 = smul.addr %s124, 7
      %s126 = smul.addr %s125, 8
      %s127 = scalar_lea.vmem %s1, %s126
      %p128 = pneg %p55
      %p129 = pneg %p52
      %p130 = pneg %p81
      %p131 = pneg %p78
      %s132 = smul.u32 30, %s13
      %p133 = scmp.lt.s32.totalorder %s132, 59
      %s134 = scalar_select %p133, %s132, 59
      %s135 = smul.addr %s134, 7
      %s136 = smul.addr %s135, 8
      %s137 = scalar_lea.vmem %s2, %s136
      %s138 = smul.u32 30, %s13
      %p139 = scmp.lt.s32.totalorder %s138, 59
      %s140 = scalar_select %p139, %s138, 59
      %s141 = smul.addr %s140, 7
      %s142 = smul.addr %s141, 8
      %s143 = scalar_lea.vmem %s1, %s142
      %s144 = smul.u32 30, %s13
      %s145 = smul.u32 30, %s13
      %p146 = scmp.lt.s32.totalorder %s145, 59
      %s147 = scalar_select %p146, %s145, 59
      %s148 = smul.addr %s147, 7
      %s149 = smul.addr %s148, 8
      %s150 = scalar_lea.vmem %s2, %s149
      %s151 = smul.u32 30, %s13
      %s152 = smul.u32 %s13, 240
      %s153 = scalar_lea.vmem %s0, %s152
      %v154 = vld [vmem:[%s153] sm:$0xff]
      %v155 = vld [vmem:[%s153 + $0x8] sm:$0xff]
      %v156 = vld [vmem:[%s153 + $0x10] sm:$0xff]
      %v157 = vld [vmem:[%s153 + $0x18] sm:$0xff]
      %v158 = vld [vmem:[%s153 + $0x20] sm:$0xff]
      %v159 = vld [vmem:[%s153 + $0x28] sm:$0xff]
      %v160 = vld [vmem:[%s153 + $0x30] sm:$0xff]
      %v161 = vld [vmem:[%s153 + $0x38] sm:$0xff]
      %v162 = vld [vmem:[%s153 + $0x40] sm:$0xff]
      %v163 = vld [vmem:[%s153 + $0x48] sm:$0xff]
      %v164 = vld [vmem:[%s153 + $0x50] sm:$0xff]
      %v165 = vld [vmem:[%s153 + $0x58] sm:$0xff]
      %v166 = vld [vmem:[%s153 + $0x60] sm:$0xff]
      %v167 = vld [vmem:[%s153 + $0x68] sm:$0xff]
      %v168 = vld [vmem:[%s153 + $0x70] sm:$0xff]
      %v169 = vld [vmem:[%s153 + $0x78] sm:$0xff]
      %v170 = vld [vmem:[%s153 + $0x80] sm:$0xff]
      %v171 = vld [vmem:[%s153 + $0x88] sm:$0xff]
      %v172 = vld [vmem:[%s153 + $0x90] sm:$0xff]
      %v173 = vld [vmem:[%s153 + $0x98] sm:$0xff]
      %v174 = vld [vmem:[%s153 + $0xa0] sm:$0xff]
      %v175 = vld [vmem:[%s153 + $0xa8] sm:$0xff]
      %v176 = vld [vmem:[%s153 + $0xb0] sm:$0xff]
      %v177 = vld [vmem:[%s153 + $0xb8] sm:$0xff]
      %v178 = vld [vmem:[%s153 + $0xc0] sm:$0xff]
      %v179 = vld [vmem:[%s153 + $0xc8] sm:$0xff]
      %v180 = vld [vmem:[%s153 + $0xd0] sm:$0xff]
      %v181 = vld [vmem:[%s153 + $0xd8] sm:$0xff]
      %v182 = vld [vmem:[%s153 + $0xe0] sm:$0xff]
      %v183 = vld [vmem:[%s153 + $0xe8] sm:$0xff]
      %v184 = vxor.u32 %v154, 2147483648
      %v185 = vxor.u32 %v155, 2147483648
      %v186 = vxor.u32 %v156, 2147483648
      %v187 = vxor.u32 %v157, 2147483648
      %v188 = vxor.u32 %v158, 2147483648
      %v189 = vxor.u32 %v159, 2147483648
      %v190 = vxor.u32 %v160, 2147483648
      %v191 = vxor.u32 %v161, 2147483648
      %v192 = vxor.u32 %v162, 2147483648
      %v193 = vxor.u32 %v163, 2147483648
      %v194 = vxor.u32 %v164, 2147483648
      %v195 = vxor.u32 %v165, 2147483648
      %v196 = vxor.u32 %v166, 2147483648
      %v197 = vxor.u32 %v167, 2147483648
      %v198 = vxor.u32 %v168, 2147483648
      %v199 = vxor.u32 %v169, 2147483648
      %v200 = vxor.u32 %v170, 2147483648
      %v201 = vxor.u32 %v171, 2147483648
      %v202 = vxor.u32 %v172, 2147483648
      %v203 = vxor.u32 %v173, 2147483648
      %v204 = vxor.u32 %v174, 2147483648
      %v205 = vxor.u32 %v175, 2147483648
      %v206 = vxor.u32 %v176, 2147483648
      %v207 = vxor.u32 %v177, 2147483648
      %v208 = vxor.u32 %v178, 2147483648
      %v209 = vxor.u32 %v179, 2147483648
      %v210 = vxor.u32 %v180, 2147483648
      %v211 = vxor.u32 %v181, 2147483648
      %v212 = vxor.u32 %v182, 2147483648
      %v213 = vxor.u32 %v183, 2147483648
      %v214 = vmul.f32 %v184, 1.442695
      %v215 = vpow.pop %v214
      %v216 = vmul.f32 %v185, 1.442695
      %v217 = vpow.pop %v216
      %v218 = vmul.f32 %v186, 1.442695
      %v219 = vpow.pop %v218
      %v220 = vmul.f32 %v187, 1.442695
      %v221 = vpow.pop %v220
      %v222 = vmul.f32 %v188, 1.442695
      %v223 = vpow.pop %v222
      %v224 = vmul.f32 %v189, 1.442695
      %v225 = vpow.pop %v224
      %v226 = vmul.f32 %v190, 1.442695
      %v227 = vpow.pop %v226
      %v228 = vmul.f32 %v191, 1.442695
      %v229 = vpow.pop %v228
      %v230 = vmul.f32 %v192, 1.442695
      %v231 = vpow.pop %v230
      %v232 = vmul.f32 %v193, 1.442695
      %v233 = vpow.pop %v232
      %v234 = vmul.f32 %v194, 1.442695
      %v235 = vpow.pop %v234
      %v236 = vmul.f32 %v195, 1.442695
      %v237 = vpow.pop %v236
      %v238 = vmul.f32 %v196, 1.442695
      %v239 = vpow.pop %v238
      %v240 = vmul.f32 %v197, 1.442695
      %v241 = vpow.pop %v240
      %v242 = vmul.f32 %v198, 1.442695
      %v243 = vpow.pop %v242
      %v244 = vmul.f32 %v199, 1.442695
      %v245 = vpow.pop %v244
      %v246 = vmul.f32 %v200, 1.442695
      %v247 = vpow.pop %v246
      %v248 = vmul.f32 %v201, 1.442695
      %v249 = vpow.pop %v248
      %v250 = vmul.f32 %v202, 1.442695
      %v251 = vpow.pop %v250
      %v252 = vmul.f32 %v203, 1.442695
      %v253 = vpow.pop %v252
      %v254 = vmul.f32 %v204, 1.442695
      %v255 = vpow.pop %v254
      %v256 = vmul.f32 %v205, 1.442695
      %v257 = vpow.pop %v256
      %v258 = vmul.f32 %v206, 1.442695
      %v259 = vpow.pop %v258
      %v260 = vmul.f32 %v207, 1.442695
      %v261 = vpow.pop %v260
      %v262 = vmul.f32 %v208, 1.442695
      %v263 = vpow.pop %v262
      %v264 = vmul.f32 %v209, 1.442695
      %v265 = vpow.pop %v264
      %v266 = vmul.f32 %v210, 1.442695
      %v267 = vpow.pop %v266
      %v268 = vmul.f32 %v211, 1.442695
      %v269 = vpow.pop %v268
      %v270 = vmul.f32 %v212, 1.442695
      %v271 = vpow.pop %v270
      %v272 = vmul.f32 %v213, 1.442695
      %v273 = vpow.pop %v272
      %v274 = vadd.f32 %v215, 1.0
      %v275 = vadd.f32 %v217, 1.0
      %v276 = vadd.f32 %v219, 1.0
      %v277 = vadd.f32 %v221, 1.0
      %v278 = vadd.f32 %v223, 1.0
      %v279 = vadd.f32 %v225, 1.0
      %v280 = vadd.f32 %v227, 1.0
      %v281 = vadd.f32 %v229, 1.0
      %v282 = vadd.f32 %v231, 1.0
      %v283 = vadd.f32 %v233, 1.0
      %v284 = vadd.f32 %v235, 1.0
      %v285 = vadd.f32 %v237, 1.0
      %v286 = vadd.f32 %v239, 1.0
      %v287 = vadd.f32 %v241, 1.0
      %v288 = vadd.f32 %v243, 1.0
      %v289 = vadd.f32 %v245, 1.0
      %v290 = vadd.f32 %v247, 1.0
      %v291 = vadd.f32 %v249, 1.0
      %v292 = vadd.f32 %v251, 1.0
      %v293 = vadd.f32 %v253, 1.0
      %v294 = vadd.f32 %v255, 1.0
      %v295 = vadd.f32 %v257, 1.0
      %v296 = vadd.f32 %v259, 1.0
      %v297 = vadd.f32 %v261, 1.0
      %v298 = vadd.f32 %v263, 1.0
      %v299 = vadd.f32 %v265, 1.0
      %v300 = vadd.f32 %v267, 1.0
      %v301 = vadd.f32 %v269, 1.0
      %v302 = vadd.f32 %v271, 1.0
      %v303 = vadd.f32 %v273, 1.0
      %v304 = vrcp.pop %v274
      %v305 = vmul.f32 1.0, %v304
      %v306 = vrcp.pop %v275
      %v307 = vmul.f32 1.0, %v306
      %v308 = vrcp.pop %v276
      %v309 = vmul.f32 1.0, %v308
      %v310 = vrcp.pop %v277
      %v311 = vmul.f32 1.0, %v310
      %v312 = vrcp.pop %v278
      %v313 = vmul.f32 1.0, %v312
      %v314 = vrcp.pop %v279
      %v315 = vmul.f32 1.0, %v314
      %v316 = vrcp.pop %v280
      %v317 = vmul.f32 1.0, %v316
      %v318 = vrcp.pop %v281
      %v319 = vmul.f32 1.0, %v318
      %v320 = vrcp.pop %v282
      %v321 = vmul.f32 1.0, %v320
      %v322 = vrcp.pop %v283
      %v323 = vmul.f32 1.0, %v322
      %v324 = vrcp.pop %v284
      %v325 = vmul.f32 1.0, %v324
      %v326 = vrcp.pop %v285
      %v327 = vmul.f32 1.0, %v326
      %v328 = vrcp.pop %v286
      %v329 = vmul.f32 1.0, %v328
      %v330 = vrcp.pop %v287
      %v331 = vmul.f32 1.0, %v330
      %v332 = vrcp.pop %v288
      %v333 = vmul.f32 1.0, %v332
      %v334 = vrcp.pop %v289
      %v335 = vmul.f32 1.0, %v334
      %v336 = vrcp.pop %v290
      %v337 = vmul.f32 1.0, %v336
      %v338 = vrcp.pop %v291
      %v339 = vmul.f32 1.0, %v338
      %v340 = vrcp.pop %v292
      %v341 = vmul.f32 1.0, %v340
      %v342 = vrcp.pop %v293
      %v343 = vmul.f32 1.0, %v342
      %v344 = vrcp.pop %v294
      %v345 = vmul.f32 1.0, %v344
      %v346 = vrcp.pop %v295
      %v347 = vmul.f32 1.0, %v346
      %v348 = vrcp.pop %v296
      %v349 = vmul.f32 1.0, %v348
      %v350 = vrcp.pop %v297
      %v351 = vmul.f32 1.0, %v350
      %v352 = vrcp.pop %v298
      %v353 = vmul.f32 1.0, %v352
      %v354 = vrcp.pop %v299
      %v355 = vmul.f32 1.0, %v354
      %v356 = vrcp.pop %v300
      %v357 = vmul.f32 1.0, %v356
      %v358 = vrcp.pop %v301
      %v359 = vmul.f32 1.0, %v358
      %v360 = vrcp.pop %v302
      %v361 = vmul.f32 1.0, %v360
      %v362 = vrcp.pop %v303
      %v363 = vmul.f32 1.0, %v362
      %v364 = vld [vmem:[%s143] sm:$0xff]
      %v365 = vld [vmem:[%s143 + $0x8] sm:$0xff]
      %v366 = vld [vmem:[%s143 + $0x10] sm:$0xff]
      %v367 = vld [vmem:[%s143 + $0x18] sm:$0xff]
      %v368 = vld [vmem:[%s143 + $0x20] sm:$0xff]
      %v369 = vld [vmem:[%s143 + $0x28] sm:$0xff]
      %v370 = vld [vmem:[%s143 + $0x30] sm:$0xff]
      %v371 = vld [vmem:[%s143 + $0x38] sm:$0xff]
      %v372 = vld [vmem:[%s143 + $0x40] sm:$0xff]
      %v373 = vld [vmem:[%s143 + $0x48] sm:$0xff]
      %v374 = vld [vmem:[%s143 + $0x50] sm:$0xff]
      %v375 = vld [vmem:[%s143 + $0x58] sm:$0xff]
      %v376 = vld [vmem:[%s143 + $0x60] sm:$0xff]
      %v377 = vld [vmem:[%s143 + $0x68] sm:$0xff]
      %v378 = vld [vmem:[%s143 + $0x70] sm:$0xff]
      %v379 = vld [vmem:[%s143 + $0x78] sm:$0xff]
      %v380 = vld [vmem:[%s143 + $0x80] sm:$0xff]
      %v381 = vld [vmem:[%s143 + $0x88] sm:$0xff]
      %v382 = vld [vmem:[%s143 + $0x90] sm:$0xff]
      %v383 = vld [vmem:[%s143 + $0x98] sm:$0xff]
      %v384 = vld [vmem:[%s143 + $0xa0] sm:$0xff]
      %v385 = vld [vmem:[%s143 + $0xa8] sm:$0xff]
      %v386 = vld [vmem:[%s143 + $0xb0] sm:$0xff]
      %v387 = vld [vmem:[%s143 + $0xb8] sm:$0xff]
      %v388 = vld [vmem:[%s143 + $0xc0] sm:$0xff]
      %v389 = vld [vmem:[%s143 + $0xc8] sm:$0xff]
      %v390 = vld [vmem:[%s143 + $0xd0] sm:$0xff]
      %v391 = vld [vmem:[%s143 + $0xd8] sm:$0xff]
      %v392 = vld [vmem:[%s143 + $0xe0] sm:$0xff]
      %v393 = vld [vmem:[%s143 + $0xe8] sm:$0xff]
      %v394 = vld [vmem:[%s143 + $0xf0] sm:$0xff]
      %v395 = vld [vmem:[%s143 + $0xf8] sm:$0xff]
      %v396 = vld [vmem:[%s143 + $0x100] sm:$0xff]
      %v397 = vld [vmem:[%s143 + $0x108] sm:$0xff]
      %v398 = vld [vmem:[%s143 + $0x110] sm:$0xff]
      %v399 = vld [vmem:[%s143 + $0x118] sm:$0xff]
      %v400 = vld [vmem:[%s143 + $0x120] sm:$0xff]
      %v401 = vld [vmem:[%s143 + $0x128] sm:$0xff]
      %v402 = vld [vmem:[%s143 + $0x130] sm:$0xff]
      %v403 = vld [vmem:[%s143 + $0x138] sm:$0xff]
      %v404 = vld [vmem:[%s143 + $0x140] sm:$0xff]
      %v405 = vld [vmem:[%s143 + $0x148] sm:$0xff]
      %v406 = vld [vmem:[%s143 + $0x150] sm:$0xff]
      %v407 = vld [vmem:[%s143 + $0x158] sm:$0xff]
      %v408 = vld [vmem:[%s143 + $0x160] sm:$0xff]
      %v409 = vld [vmem:[%s143 + $0x168] sm:$0xff]
      %v410 = vld [vmem:[%s143 + $0x170] sm:$0xff]
      %v411 = vld [vmem:[%s143 + $0x178] sm:$0xff]
      %v412 = vld [vmem:[%s143 + $0x180] sm:$0xff]
      %v413 = vld [vmem:[%s143 + $0x188] sm:$0xff]
      %v414 = vld [vmem:[%s143 + $0x190] sm:$0xff]
      %v415 = vld [vmem:[%s143 + $0x198] sm:$0xff]
      %v416 = vld [vmem:[%s143 + $0x1a0] sm:$0xff]
      %v417 = vld [vmem:[%s143 + $0x1a8] sm:$0xff]
      %v418 = vld [vmem:[%s143 + $0x1b0] sm:$0xff]
      %v419 = vld [vmem:[%s143 + $0x1b8] sm:$0xff]
      %v420 = vld [vmem:[%s143 + $0x1c0] sm:$0xff]
      %v421 = vld [vmem:[%s143 + $0x1c8] sm:$0xff]
      %v422 = vld [vmem:[%s143 + $0x1d0] sm:$0xff]
      %v423 = vld [vmem:[%s143 + $0x1d8] sm:$0xff]
      %v424 = vld [vmem:[%s143 + $0x1e0] sm:$0xff]
      %v425 = vld [vmem:[%s143 + $0x1e8] sm:$0xff]
      %v426 = vld [vmem:[%s143 + $0x1f0] sm:$0xff]
      %v427 = vld [vmem:[%s143 + $0x1f8] sm:$0xff]
      %v428 = vld [vmem:[%s143 + $0x200] sm:$0xff]
      %v429 = vld [vmem:[%s143 + $0x208] sm:$0xff]
      %v430 = vld [vmem:[%s143 + $0x210] sm:$0xff]
      %v431 = vld [vmem:[%s143 + $0x218] sm:$0xff]
      %v432 = vld [vmem:[%s143 + $0x220] sm:$0xff]
      %v433 = vld [vmem:[%s143 + $0x228] sm:$0xff]
      %v434 = vld [vmem:[%s143 + $0x230] sm:$0xff]
      %v435 = vld [vmem:[%s143 + $0x238] sm:$0xff]
      %v436 = vld [vmem:[%s143 + $0x240] sm:$0xff]
      %v437 = vld [vmem:[%s143 + $0x248] sm:$0xff]
      %v438 = vld [vmem:[%s143 + $0x250] sm:$0xff]
      %v439 = vld [vmem:[%s143 + $0x258] sm:$0xff]
      %v440 = vld [vmem:[%s143 + $0x260] sm:$0xff]
      %v441 = vld [vmem:[%s143 + $0x268] sm:$0xff]
      %v442 = vld [vmem:[%s143 + $0x270] sm:$0xff]
      %v443 = vld [vmem:[%s143 + $0x278] sm:$0xff]
      %v444 = vld [vmem:[%s143 + $0x280] sm:$0xff]
      %v445 = vld [vmem:[%s143 + $0x288] sm:$0xff]
      %v446 = vld [vmem:[%s143 + $0x290] sm:$0xff]
      %v447 = vld [vmem:[%s143 + $0x298] sm:$0xff]
      %v448 = vld [vmem:[%s143 + $0x2a0] sm:$0xff]
      %v449 = vld [vmem:[%s143 + $0x2a8] sm:$0xff]
      %v450 = vld [vmem:[%s143 + $0x2b0] sm:$0xff]
      %v451 = vld [vmem:[%s143 + $0x2b8] sm:$0xff]
      %v452 = vld [vmem:[%s143 + $0x2c0] sm:$0xff]
      %v453 = vld [vmem:[%s143 + $0x2c8] sm:$0xff]
      %v454 = vld [vmem:[%s143 + $0x2d0] sm:$0xff]
      %v455 = vld [vmem:[%s143 + $0x2d8] sm:$0xff]
      %v456 = vld [vmem:[%s143 + $0x2e0] sm:$0xff]
      %v457 = vld [vmem:[%s143 + $0x2e8] sm:$0xff]
      %v458 = vld [vmem:[%s143 + $0x2f0] sm:$0xff]
      %v459 = vld [vmem:[%s143 + $0x2f8] sm:$0xff]
      %v460 = vld [vmem:[%s143 + $0x300] sm:$0xff]
      %v461 = vld [vmem:[%s143 + $0x308] sm:$0xff]
      %v462 = vld [vmem:[%s143 + $0x310] sm:$0xff]
      %v463 = vld [vmem:[%s143 + $0x318] sm:$0xff]
      %v464 = vld [vmem:[%s143 + $0x320] sm:$0xff]
      %v465 = vld [vmem:[%s143 + $0x328] sm:$0xff]
      %v466 = vld [vmem:[%s143 + $0x330] sm:$0xff]
      %v467 = vld [vmem:[%s143 + $0x338] sm:$0xff]
      %v468 = vld [vmem:[%s143 + $0x340] sm:$0xff]
      %v469 = vld [vmem:[%s143 + $0x348] sm:$0xff]
      %v470 = vld [vmem:[%s143 + $0x350] sm:$0xff]
      %v471 = vld [vmem:[%s143 + $0x358] sm:$0xff]
      %v472 = vld [vmem:[%s143 + $0x360] sm:$0xff]
      %v473 = vld [vmem:[%s143 + $0x368] sm:$0xff]
      %v474 = vld [vmem:[%s143 + $0x370] sm:$0xff]
      %v475 = vld [vmem:[%s143 + $0x378] sm:$0xff]
      %v476 = vld [vmem:[%s143 + $0x380] sm:$0xff]
      %v477 = vld [vmem:[%s143 + $0x388] sm:$0xff]
      %v478 = vld [vmem:[%s143 + $0x390] sm:$0xff]
      %v479 = vld [vmem:[%s143 + $0x398] sm:$0xff]
      %v480 = vld [vmem:[%s143 + $0x3a0] sm:$0xff]
      %v481 = vld [vmem:[%s143 + $0x3a8] sm:$0xff]
      %v482 = vld [vmem:[%s143 + $0x3b0] sm:$0xff]
      %v483 = vld [vmem:[%s143 + $0x3b8] sm:$0xff]
      %v484 = vld [vmem:[%s143 + $0x3c0] sm:$0xff]
      %v485 = vld [vmem:[%s143 + $0x3c8] sm:$0xff]
      %v486 = vld [vmem:[%s143 + $0x3d0] sm:$0xff]
      %v487 = vld [vmem:[%s143 + $0x3d8] sm:$0xff]
      %v488 = vld [vmem:[%s143 + $0x3e0] sm:$0xff]
      %v489 = vld [vmem:[%s143 + $0x3e8] sm:$0xff]
      %v490 = vld [vmem:[%s143 + $0x3f0] sm:$0xff]
      %v491 = vld [vmem:[%s143 + $0x3f8] sm:$0xff]
      %v492 = vld [vmem:[%s143 + $0x400] sm:$0xff]
      %v493 = vld [vmem:[%s143 + $0x408] sm:$0xff]
      %v494 = vld [vmem:[%s143 + $0x410] sm:$0xff]
      %v495 = vld [vmem:[%s143 + $0x418] sm:$0xff]
      %v496 = vld [vmem:[%s143 + $0x420] sm:$0xff]
      %v497 = vld [vmem:[%s143 + $0x428] sm:$0xff]
      %v498 = vld [vmem:[%s143 + $0x430] sm:$0xff]
      %v499 = vld [vmem:[%s143 + $0x438] sm:$0xff]
      %v500 = vld [vmem:[%s143 + $0x440] sm:$0xff]
      %v501 = vld [vmem:[%s143 + $0x448] sm:$0xff]
      %v502 = vld [vmem:[%s143 + $0x450] sm:$0xff]
      %v503 = vld [vmem:[%s143 + $0x458] sm:$0xff]
      %v504 = vld [vmem:[%s143 + $0x460] sm:$0xff]
      %v505 = vld [vmem:[%s143 + $0x468] sm:$0xff]
      %v506 = vld [vmem:[%s143 + $0x470] sm:$0xff]
      %v507 = vld [vmem:[%s143 + $0x478] sm:$0xff]
      %v508 = vld [vmem:[%s143 + $0x480] sm:$0xff]
      %v509 = vld [vmem:[%s143 + $0x488] sm:$0xff]
      %v510 = vld [vmem:[%s143 + $0x490] sm:$0xff]
      %v511 = vld [vmem:[%s143 + $0x498] sm:$0xff]
      %v512 = vld [vmem:[%s143 + $0x4a0] sm:$0xff]
      %v513 = vld [vmem:[%s143 + $0x4a8] sm:$0xff]
      %v514 = vld [vmem:[%s143 + $0x4b0] sm:$0xff]
      %v515 = vld [vmem:[%s143 + $0x4b8] sm:$0xff]
      %v516 = vld [vmem:[%s143 + $0x4c0] sm:$0xff]
      %v517 = vld [vmem:[%s143 + $0x4c8] sm:$0xff]
      %v518 = vld [vmem:[%s143 + $0x4d0] sm:$0xff]
      %v519 = vld [vmem:[%s143 + $0x4d8] sm:$0xff]
      %v520 = vld [vmem:[%s143 + $0x4e0] sm:$0xff]
      %v521 = vld [vmem:[%s143 + $0x4e8] sm:$0xff]
      %v522 = vld [vmem:[%s143 + $0x4f0] sm:$0xff]
      %v523 = vld [vmem:[%s143 + $0x4f8] sm:$0xff]
      %v524 = vld [vmem:[%s143 + $0x500] sm:$0xff]
      %v525 = vld [vmem:[%s143 + $0x508] sm:$0xff]
      %v526 = vld [vmem:[%s143 + $0x510] sm:$0xff]
      %v527 = vld [vmem:[%s143 + $0x518] sm:$0xff]
      %v528 = vld [vmem:[%s143 + $0x520] sm:$0xff]
      %v529 = vld [vmem:[%s143 + $0x528] sm:$0xff]
      %v530 = vld [vmem:[%s143 + $0x530] sm:$0xff]
      %v531 = vld [vmem:[%s143 + $0x538] sm:$0xff]
      %v532 = vld [vmem:[%s143 + $0x540] sm:$0xff]
      %v533 = vld [vmem:[%s143 + $0x548] sm:$0xff]
      %v534 = vld [vmem:[%s143 + $0x550] sm:$0xff]
      %v535 = vld [vmem:[%s143 + $0x558] sm:$0xff]
      %v536 = vld [vmem:[%s143 + $0x560] sm:$0xff]
      %v537 = vld [vmem:[%s143 + $0x568] sm:$0xff]
      %v538 = vld [vmem:[%s143 + $0x570] sm:$0xff]
      %v539 = vld [vmem:[%s143 + $0x578] sm:$0xff]
      %v540 = vld [vmem:[%s143 + $0x580] sm:$0xff]
      %v541 = vld [vmem:[%s143 + $0x588] sm:$0xff]
      %v542 = vld [vmem:[%s143 + $0x590] sm:$0xff]
      %v543 = vld [vmem:[%s143 + $0x598] sm:$0xff]
      %v544 = vld [vmem:[%s143 + $0x5a0] sm:$0xff]
      %v545 = vld [vmem:[%s143 + $0x5a8] sm:$0xff]
      %v546 = vld [vmem:[%s143 + $0x5b0] sm:$0xff]
      %v547 = vld [vmem:[%s143 + $0x5b8] sm:$0xff]
      %v548 = vld [vmem:[%s143 + $0x5c0] sm:$0xff]
      %v549 = vld [vmem:[%s143 + $0x5c8] sm:$0xff]
      %v550 = vld [vmem:[%s143 + $0x5d0] sm:$0xff]
      %v551 = vld [vmem:[%s143 + $0x5d8] sm:$0xff]
      %v552 = vld [vmem:[%s143 + $0x5e0] sm:$0xff]
      %v553 = vld [vmem:[%s143 + $0x5e8] sm:$0xff]
      %v554 = vld [vmem:[%s143 + $0x5f0] sm:$0xff]
      %v555 = vld [vmem:[%s143 + $0x5f8] sm:$0xff]
      %v556 = vld [vmem:[%s143 + $0x600] sm:$0xff]
      %v557 = vld [vmem:[%s143 + $0x608] sm:$0xff]
      %v558 = vld [vmem:[%s143 + $0x610] sm:$0xff]
      %v559 = vld [vmem:[%s143 + $0x618] sm:$0xff]
      %v560 = vld [vmem:[%s143 + $0x620] sm:$0xff]
      %v561 = vld [vmem:[%s143 + $0x628] sm:$0xff]
      %v562 = vld [vmem:[%s143 + $0x630] sm:$0xff]
      %v563 = vld [vmem:[%s143 + $0x638] sm:$0xff]
      %v564 = vld [vmem:[%s143 + $0x640] sm:$0xff]
      %v565 = vld [vmem:[%s143 + $0x648] sm:$0xff]
      %v566 = vld [vmem:[%s143 + $0x650] sm:$0xff]
      %v567 = vld [vmem:[%s143 + $0x658] sm:$0xff]
      %v568 = vld [vmem:[%s143 + $0x660] sm:$0xff]
      %v569 = vld [vmem:[%s143 + $0x668] sm:$0xff]
      %v570 = vld [vmem:[%s143 + $0x670] sm:$0xff]
      %v571 = vld [vmem:[%s143 + $0x678] sm:$0xff]
      %v572 = vld [vmem:[%s143 + $0x680] sm:$0xff]
      %v573 = vld [vmem:[%s143 + $0x688] sm:$0xff]
      %575 = vset.pattern.permute.xlu0 0
      %576 = vperm.xlu0 %575, %v305
      %v577 = vpop.permute.xlu0 %576
      %580 = vset.pattern.permute.xlu0 0
      %581 = vperm.xlu0 %580, %v307
      %v582 = vpop.permute.xlu0 %581
      %585 = vset.pattern.permute.xlu0 0
      %586 = vperm.xlu0 %585, %v309
      %v587 = vpop.permute.xlu0 %586
      %590 = vset.pattern.permute.xlu0 0
      %591 = vperm.xlu0 %590, %v311
      %v592 = vpop.permute.xlu0 %591
      %595 = vset.pattern.permute.xlu0 0
      %596 = vperm.xlu0 %595, %v313
      %v597 = vpop.permute.xlu0 %596
      %600 = vset.pattern.permute.xlu0 0
      %601 = vperm.xlu0 %600, %v315
      %v602 = vpop.permute.xlu0 %601
      %605 = vset.pattern.permute.xlu0 0
      %606 = vperm.xlu0 %605, %v317
      %v607 = vpop.permute.xlu0 %606
      %610 = vset.pattern.permute.xlu0 0
      %611 = vperm.xlu0 %610, %v319
      %v612 = vpop.permute.xlu0 %611
      %615 = vset.pattern.permute.xlu0 0
      %616 = vperm.xlu0 %615, %v321
      %v617 = vpop.permute.xlu0 %616
      %620 = vset.pattern.permute.xlu0 0
      %621 = vperm.xlu0 %620, %v323
      %v622 = vpop.permute.xlu0 %621
      %625 = vset.pattern.permute.xlu0 0
      %626 = vperm.xlu0 %625, %v325
      %v627 = vpop.permute.xlu0 %626
      %630 = vset.pattern.permute.xlu0 0
      %631 = vperm.xlu0 %630, %v327
      %v632 = vpop.permute.xlu0 %631
      %635 = vset.pattern.permute.xlu0 0
      %636 = vperm.xlu0 %635, %v329
      %v637 = vpop.permute.xlu0 %636
      %640 = vset.pattern.permute.xlu0 0
      %641 = vperm.xlu0 %640, %v331
      %v642 = vpop.permute.xlu0 %641
      %645 = vset.pattern.permute.xlu0 0
      %646 = vperm.xlu0 %645, %v333
      %v647 = vpop.permute.xlu0 %646
      %650 = vset.pattern.permute.xlu0 0
      %651 = vperm.xlu0 %650, %v335
      %v652 = vpop.permute.xlu0 %651
      %655 = vset.pattern.permute.xlu0 0
      %656 = vperm.xlu0 %655, %v337
      %v657 = vpop.permute.xlu0 %656
      %660 = vset.pattern.permute.xlu0 0
      %661 = vperm.xlu0 %660, %v339
      %v662 = vpop.permute.xlu0 %661
      %665 = vset.pattern.permute.xlu0 0
      %666 = vperm.xlu0 %665, %v341
      %v667 = vpop.permute.xlu0 %666
      %670 = vset.pattern.permute.xlu0 0
      %671 = vperm.xlu0 %670, %v343
      %v672 = vpop.permute.xlu0 %671
      %675 = vset.pattern.permute.xlu0 0
      %676 = vperm.xlu0 %675, %v345
      %v677 = vpop.permute.xlu0 %676
      %680 = vset.pattern.permute.xlu0 0
      %681 = vperm.xlu0 %680, %v347
      %v682 = vpop.permute.xlu0 %681
      %685 = vset.pattern.permute.xlu0 0
      %686 = vperm.xlu0 %685, %v349
      %v687 = vpop.permute.xlu0 %686
      %690 = vset.pattern.permute.xlu0 0
      %691 = vperm.xlu0 %690, %v351
      %v692 = vpop.permute.xlu0 %691
      %695 = vset.pattern.permute.xlu0 0
      %696 = vperm.xlu0 %695, %v353
      %v697 = vpop.permute.xlu0 %696
      %700 = vset.pattern.permute.xlu0 0
      %701 = vperm.xlu0 %700, %v355
      %v702 = vpop.permute.xlu0 %701
      %705 = vset.pattern.permute.xlu0 0
      %706 = vperm.xlu0 %705, %v357
      %v707 = vpop.permute.xlu0 %706
      %710 = vset.pattern.permute.xlu0 0
      %711 = vperm.xlu0 %710, %v359
      %v712 = vpop.permute.xlu0 %711
      %715 = vset.pattern.permute.xlu0 0
      %716 = vperm.xlu0 %715, %v361
      %v717 = vpop.permute.xlu0 %716
      %720 = vset.pattern.permute.xlu0 0
      %721 = vperm.xlu0 %720, %v363
      %v722 = vpop.permute.xlu0 %721
      %v724 = vmul.f32 %v577, %v364
      %v725 = vmul.f32 %v577, %v365
      %v726 = vmul.f32 %v577, %v366
      %v727 = vmul.f32 %v577, %v367
      %v728 = vmul.f32 %v577, %v368
      %v729 = vmul.f32 %v577, %v369
      %v730 = vmul.f32 %v577, %v370
      %v731 = vmul.f32 %v582, %v371
      %v732 = vmul.f32 %v582, %v372
      %v733 = vmul.f32 %v582, %v373
      %v734 = vmul.f32 %v582, %v374
      %v735 = vmul.f32 %v582, %v375
      %v736 = vmul.f32 %v582, %v376
      %v737 = vmul.f32 %v582, %v377
      %v738 = vmul.f32 %v587, %v378
      %v739 = vmul.f32 %v587, %v379
      %v740 = vmul.f32 %v587, %v380
      %v741 = vmul.f32 %v587, %v381
      %v742 = vmul.f32 %v587, %v382
      %v743 = vmul.f32 %v587, %v383
      %v744 = vmul.f32 %v587, %v384
      %v745 = vmul.f32 %v592, %v385
      %v746 = vmul.f32 %v592, %v386
      %v747 = vmul.f32 %v592, %v387
      %v748 = vmul.f32 %v592, %v388
      %v749 = vmul.f32 %v592, %v389
      %v750 = vmul.f32 %v592, %v390
      %v751 = vmul.f32 %v592, %v391
      %v752 = vmul.f32 %v597, %v392
      %v753 = vmul.f32 %v597, %v393
      %v754 = vmul.f32 %v597, %v394
      %v755 = vmul.f32 %v597, %v395
      %v756 = vmul.f32 %v597, %v396
      %v757 = vmul.f32 %v597, %v397
      %v758 = vmul.f32 %v597, %v398
      %v759 = vmul.f32 %v602, %v399
      %v760 = vmul.f32 %v602, %v400
      %v761 = vmul.f32 %v602, %v401
      %v762 = vmul.f32 %v602, %v402
      %v763 = vmul.f32 %v602, %v403
      %v764 = vmul.f32 %v602, %v404
      %v765 = vmul.f32 %v602, %v405
      %v766 = vmul.f32 %v607, %v406
      %v767 = vmul.f32 %v607, %v407
      %v768 = vmul.f32 %v607, %v408
      %v769 = vmul.f32 %v607, %v409
      %v770 = vmul.f32 %v607, %v410
      %v771 = vmul.f32 %v607, %v411
      %v772 = vmul.f32 %v607, %v412
      %v773 = vmul.f32 %v612, %v413
      %v774 = vmul.f32 %v612, %v414
      %v775 = vmul.f32 %v612, %v415
      %v776 = vmul.f32 %v612, %v416
      %v777 = vmul.f32 %v612, %v417
      %v778 = vmul.f32 %v612, %v418
      %v779 = vmul.f32 %v612, %v419
      %v780 = vmul.f32 %v617, %v420
      %v781 = vmul.f32 %v617, %v421
      %v782 = vmul.f32 %v617, %v422
      %v783 = vmul.f32 %v617, %v423
      %v784 = vmul.f32 %v617, %v424
      %v785 = vmul.f32 %v617, %v425
      %v786 = vmul.f32 %v617, %v426
      %v787 = vmul.f32 %v622, %v427
      %v788 = vmul.f32 %v622, %v428
      %v789 = vmul.f32 %v622, %v429
      %v790 = vmul.f32 %v622, %v430
      %v791 = vmul.f32 %v622, %v431
      %v792 = vmul.f32 %v622, %v432
      %v793 = vmul.f32 %v622, %v433
      %v794 = vmul.f32 %v627, %v434
      %v795 = vmul.f32 %v627, %v435
      %v796 = vmul.f32 %v627, %v436
      %v797 = vmul.f32 %v627, %v437
      %v798 = vmul.f32 %v627, %v438
      %v799 = vmul.f32 %v627, %v439
      %v800 = vmul.f32 %v627, %v440
      %v801 = vmul.f32 %v632, %v441
      %v802 = vmul.f32 %v632, %v442
      %v803 = vmul.f32 %v632, %v443
      %v804 = vmul.f32 %v632, %v444
      %v805 = vmul.f32 %v632, %v445
      %v806 = vmul.f32 %v632, %v446
      %v807 = vmul.f32 %v632, %v447
      %v808 = vmul.f32 %v637, %v448
      %v809 = vmul.f32 %v637, %v449
      %v810 = vmul.f32 %v637, %v450
      %v811 = vmul.f32 %v637, %v451
      %v812 = vmul.f32 %v637, %v452
      %v813 = vmul.f32 %v637, %v453
      %v814 = vmul.f32 %v637, %v454
      %v815 = vmul.f32 %v642, %v455
      %v816 = vmul.f32 %v642, %v456
      %v817 = vmul.f32 %v642, %v457
      %v818 = vmul.f32 %v642, %v458
      %v819 = vmul.f32 %v642, %v459
      %v820 = vmul.f32 %v642, %v460
      %v821 = vmul.f32 %v642, %v461
      %v822 = vmul.f32 %v647, %v462
      %v823 = vmul.f32 %v647, %v463
      %v824 = vmul.f32 %v647, %v464
      %v825 = vmul.f32 %v647, %v465
      %v826 = vmul.f32 %v647, %v466
      %v827 = vmul.f32 %v647, %v467
      %v828 = vmul.f32 %v647, %v468
      %v829 = vmul.f32 %v652, %v469
      %v830 = vmul.f32 %v652, %v470
      %v831 = vmul.f32 %v652, %v471
      %v832 = vmul.f32 %v652, %v472
      %v833 = vmul.f32 %v652, %v473
      %v834 = vmul.f32 %v652, %v474
      %v835 = vmul.f32 %v652, %v475
      %v836 = vmul.f32 %v657, %v476
      %v837 = vmul.f32 %v657, %v477
      %v838 = vmul.f32 %v657, %v478
      %v839 = vmul.f32 %v657, %v479
      %v840 = vmul.f32 %v657, %v480
      %v841 = vmul.f32 %v657, %v481
      %v842 = vmul.f32 %v657, %v482
      %v843 = vmul.f32 %v662, %v483
      %v844 = vmul.f32 %v662, %v484
      %v845 = vmul.f32 %v662, %v485
      %v846 = vmul.f32 %v662, %v486
      %v847 = vmul.f32 %v662, %v487
      %v848 = vmul.f32 %v662, %v488
      %v849 = vmul.f32 %v662, %v489
      %v850 = vmul.f32 %v667, %v490
      %v851 = vmul.f32 %v667, %v491
      %v852 = vmul.f32 %v667, %v492
      %v853 = vmul.f32 %v667, %v493
      %v854 = vmul.f32 %v667, %v494
      %v855 = vmul.f32 %v667, %v495
      %v856 = vmul.f32 %v667, %v496
      %v857 = vmul.f32 %v672, %v497
      %v858 = vmul.f32 %v672, %v498
      %v859 = vmul.f32 %v672, %v499
      %v860 = vmul.f32 %v672, %v500
      %v861 = vmul.f32 %v672, %v501
      %v862 = vmul.f32 %v672, %v502
      %v863 = vmul.f32 %v672, %v503
      %v864 = vmul.f32 %v677, %v504
      %v865 = vmul.f32 %v677, %v505
      %v866 = vmul.f32 %v677, %v506
      %v867 = vmul.f32 %v677, %v507
      %v868 = vmul.f32 %v677, %v508
      %v869 = vmul.f32 %v677, %v509
      %v870 = vmul.f32 %v677, %v510
      %v871 = vmul.f32 %v682, %v511
      %v872 = vmul.f32 %v682, %v512
      %v873 = vmul.f32 %v682, %v513
      %v874 = vmul.f32 %v682, %v514
      %v875 = vmul.f32 %v682, %v515
      %v876 = vmul.f32 %v682, %v516
      %v877 = vmul.f32 %v682, %v517
      %v878 = vmul.f32 %v687, %v518
      %v879 = vmul.f32 %v687, %v519
      %v880 = vmul.f32 %v687, %v520
      %v881 = vmul.f32 %v687, %v521
      %v882 = vmul.f32 %v687, %v522
      %v883 = vmul.f32 %v687, %v523
      %v884 = vmul.f32 %v687, %v524
      %v885 = vmul.f32 %v692, %v525
      %v886 = vmul.f32 %v692, %v526
      %v887 = vmul.f32 %v692, %v527
      %v888 = vmul.f32 %v692, %v528
      %v889 = vmul.f32 %v692, %v529
      %v890 = vmul.f32 %v692, %v530
      %v891 = vmul.f32 %v692, %v531
      %v892 = vmul.f32 %v697, %v532
      %v893 = vmul.f32 %v697, %v533
      %v894 = vmul.f32 %v697, %v534
      %v895 = vmul.f32 %v697, %v535
      %v896 = vmul.f32 %v697, %v536
      %v897 = vmul.f32 %v697, %v537
      %v898 = vmul.f32 %v697, %v538
      %v899 = vmul.f32 %v702, %v539
      %v900 = vmul.f32 %v702, %v540
      %v901 = vmul.f32 %v702, %v541
      %v902 = vmul.f32 %v702, %v542
      %v903 = vmul.f32 %v702, %v543
      %v904 = vmul.f32 %v702, %v544
      %v905 = vmul.f32 %v702, %v545
      %v906 = vmul.f32 %v707, %v546
      %v907 = vmul.f32 %v707, %v547
      %v908 = vmul.f32 %v707, %v548
      %v909 = vmul.f32 %v707, %v549
      %v910 = vmul.f32 %v707, %v550
      %v911 = vmul.f32 %v707, %v551
      %v912 = vmul.f32 %v707, %v552
      %v913 = vmul.f32 %v712, %v553
      %v914 = vmul.f32 %v712, %v554
      %v915 = vmul.f32 %v712, %v555
      %v916 = vmul.f32 %v712, %v556
      %v917 = vmul.f32 %v712, %v557
      %v918 = vmul.f32 %v712, %v558
      %v919 = vmul.f32 %v712, %v559
      %v920 = vmul.f32 %v717, %v560
      %v921 = vmul.f32 %v717, %v561
      %v922 = vmul.f32 %v717, %v562
      %v923 = vmul.f32 %v717, %v563
      %v924 = vmul.f32 %v717, %v564
      %v925 = vmul.f32 %v717, %v565
      %v926 = vmul.f32 %v717, %v566
      %v927 = vmul.f32 %v722, %v567
      %v928 = vmul.f32 %v722, %v568
      %v929 = vmul.f32 %v722, %v569
      %v930 = vmul.f32 %v722, %v570
      %v931 = vmul.f32 %v722, %v571
      %v932 = vmul.f32 %v722, %v572
      %v933 = vmul.f32 %v722, %v573
      %934 = vst [vmem:[%s150] sm:$0xff] %v724
      %935 = vst [vmem:[%s150 + $0x8] sm:$0xff] %v725
      %936 = vst [vmem:[%s150 + $0x10] sm:$0xff] %v726
      %937 = vst [vmem:[%s150 + $0x18] sm:$0xff] %v727
      %938 = vst [vmem:[%s150 + $0x20] sm:$0xff] %v728
      %939 = vst [vmem:[%s150 + $0x28] sm:$0xff] %v729
      %vm940 = vcmask 130048
      %941 = vst.msk [vmem:[%s150 + $0x30] sm:$0xff] %vm940, %v730
      %942 = vst [vmem:[%s150 + $0x38] sm:$0xff] %v731
      %943 = vst [vmem:[%s150 + $0x40] sm:$0xff] %v732
      %944 = vst [vmem:[%s150 + $0x48] sm:$0xff] %v733
      %945 = vst [vmem:[%s150 + $0x50] sm:$0xff] %v734
      %946 = vst [vmem:[%s150 + $0x58] sm:$0xff] %v735
      %947 = vst [vmem:[%s150 + $0x60] sm:$0xff] %v736
      %948 = vst.msk [vmem:[%s150 + $0x68] sm:$0xff] %vm940, %v737
      %949 = vst [vmem:[%s150 + $0x70] sm:$0xff] %v738
      %950 = vst [vmem:[%s150 + $0x78] sm:$0xff] %v739
      %951 = vst [vmem:[%s150 + $0x80] sm:$0xff] %v740
      %952 = vst [vmem:[%s150 + $0x88] sm:$0xff] %v741
      %953 = vst [vmem:[%s150 + $0x90] sm:$0xff] %v742
      %954 = vst [vmem:[%s150 + $0x98] sm:$0xff] %v743
      %955 = vst.msk [vmem:[%s150 + $0xa0] sm:$0xff] %vm940, %v744
      %956 = vst [vmem:[%s150 + $0xa8] sm:$0xff] %v745
      %957 = vst [vmem:[%s150 + $0xb0] sm:$0xff] %v746
      %958 = vst [vmem:[%s150 + $0xb8] sm:$0xff] %v747
      %959 = vst [vmem:[%s150 + $0xc0] sm:$0xff] %v748
      %960 = vst [vmem:[%s150 + $0xc8] sm:$0xff] %v749
      %961 = vst [vmem:[%s150 + $0xd0] sm:$0xff] %v750
      %962 = vst.msk [vmem:[%s150 + $0xd8] sm:$0xff] %vm940, %v751
      %963 = vst [vmem:[%s150 + $0xe0] sm:$0xff] %v752
      %964 = vst [vmem:[%s150 + $0xe8] sm:$0xff] %v753
      %965 = vst [vmem:[%s150 + $0xf0] sm:$0xff] %v754
      %966 = vst [vmem:[%s150 + $0xf8] sm:$0xff] %v755
      %967 = vst [vmem:[%s150 + $0x100] sm:$0xff] %v756
      %968 = vst [vmem:[%s150 + $0x108] sm:$0xff] %v757
      %969 = vst.msk [vmem:[%s150 + $0x110] sm:$0xff] %vm940, %v758
      %970 = vst [vmem:[%s150 + $0x118] sm:$0xff] %v759
      %971 = vst [vmem:[%s150 + $0x120] sm:$0xff] %v760
      %972 = vst [vmem:[%s150 + $0x128] sm:$0xff] %v761
      %973 = vst [vmem:[%s150 + $0x130] sm:$0xff] %v762
      %974 = vst [vmem:[%s150 + $0x138] sm:$0xff] %v763
      %975 = vst [vmem:[%s150 + $0x140] sm:$0xff] %v764
      %976 = vst.msk [vmem:[%s150 + $0x148] sm:$0xff] %vm940, %v765
      %977 = vst [vmem:[%s150 + $0x150] sm:$0xff] %v766
      %978 = vst [vmem:[%s150 + $0x158] sm:$0xff] %v767
      %979 = vst [vmem:[%s150 + $0x160] sm:$0xff] %v768
      %980 = vst [vmem:[%s150 + $0x168] sm:$0xff] %v769
      %981 = vst [vmem:[%s150 + $0x170] sm:$0xff] %v770
      %982 = vst [vmem:[%s150 + $0x178] sm:$0xff] %v771
      %983 = vst.msk [vmem:[%s150 + $0x180] sm:$0xff] %vm940, %v772
      %984 = vst [vmem:[%s150 + $0x188] sm:$0xff] %v773
      %985 = vst [vmem:[%s150 + $0x190] sm:$0xff] %v774
      %986 = vst [vmem:[%s150 + $0x198] sm:$0xff] %v775
      %987 = vst [vmem:[%s150 + $0x1a0] sm:$0xff] %v776
      %988 = vst [vmem:[%s150 + $0x1a8] sm:$0xff] %v777
      %989 = vst [vmem:[%s150 + $0x1b0] sm:$0xff] %v778
      %990 = vst.msk [vmem:[%s150 + $0x1b8] sm:$0xff] %vm940, %v779
      %991 = vst [vmem:[%s150 + $0x1c0] sm:$0xff] %v780
      %992 = vst [vmem:[%s150 + $0x1c8] sm:$0xff] %v781
      %993 = vst [vmem:[%s150 + $0x1d0] sm:$0xff] %v782
      %994 = vst [vmem:[%s150 + $0x1d8] sm:$0xff] %v783
      %995 = vst [vmem:[%s150 + $0x1e0] sm:$0xff] %v784
      %996 = vst [vmem:[%s150 + $0x1e8] sm:$0xff] %v785
      %997 = vst.msk [vmem:[%s150 + $0x1f0] sm:$0xff] %vm940, %v786
      %998 = vst [vmem:[%s150 + $0x1f8] sm:$0xff] %v787
      %999 = vst [vmem:[%s150 + $0x200] sm:$0xff] %v788
      %1000 = vst [vmem:[%s150 + $0x208] sm:$0xff] %v789
      %1001 = vst [vmem:[%s150 + $0x210] sm:$0xff] %v790
      %1002 = vst [vmem:[%s150 + $0x218] sm:$0xff] %v791
      %1003 = vst [vmem:[%s150 + $0x220] sm:$0xff] %v792
      %1004 = vst.msk [vmem:[%s150 + $0x228] sm:$0xff] %vm940, %v793
      %1005 = vst [vmem:[%s150 + $0x230] sm:$0xff] %v794
      %1006 = vst [vmem:[%s150 + $0x238] sm:$0xff] %v795
      %1007 = vst [vmem:[%s150 + $0x240] sm:$0xff] %v796
      %1008 = vst [vmem:[%s150 + $0x248] sm:$0xff] %v797
      %1009 = vst [vmem:[%s150 + $0x250] sm:$0xff] %v798
      %1010 = vst [vmem:[%s150 + $0x258] sm:$0xff] %v799
      %1011 = vst.msk [vmem:[%s150 + $0x260] sm:$0xff] %vm940, %v800
      %1012 = vst [vmem:[%s150 + $0x268] sm:$0xff] %v801
      %1013 = vst [vmem:[%s150 + $0x270] sm:$0xff] %v802
      %1014 = vst [vmem:[%s150 + $0x278] sm:$0xff] %v803
      %1015 = vst [vmem:[%s150 + $0x280] sm:$0xff] %v804
      %1016 = vst [vmem:[%s150 + $0x288] sm:$0xff] %v805
      %1017 = vst [vmem:[%s150 + $0x290] sm:$0xff] %v806
      %1018 = vst.msk [vmem:[%s150 + $0x298] sm:$0xff] %vm940, %v807
      %1019 = vst [vmem:[%s150 + $0x2a0] sm:$0xff] %v808
      %1020 = vst [vmem:[%s150 + $0x2a8] sm:$0xff] %v809
      %1021 = vst [vmem:[%s150 + $0x2b0] sm:$0xff] %v810
      %1022 = vst [vmem:[%s150 + $0x2b8] sm:$0xff] %v811
      %1023 = vst [vmem:[%s150 + $0x2c0] sm:$0xff] %v812
      %1024 = vst [vmem:[%s150 + $0x2c8] sm:$0xff] %v813
      %1025 = vst.msk [vmem:[%s150 + $0x2d0] sm:$0xff] %vm940, %v814
      %1026 = vst [vmem:[%s150 + $0x2d8] sm:$0xff] %v815
      %1027 = vst [vmem:[%s150 + $0x2e0] sm:$0xff] %v816
      %1028 = vst [vmem:[%s150 + $0x2e8] sm:$0xff] %v817
      %1029 = vst [vmem:[%s150 + $0x2f0] sm:$0xff] %v818
      %1030 = vst [vmem:[%s150 + $0x2f8] sm:$0xff] %v819
      %1031 = vst [vmem:[%s150 + $0x300] sm:$0xff] %v820
      %1032 = vst.msk [vmem:[%s150 + $0x308] sm:$0xff] %vm940, %v821
      %1033 = vst [vmem:[%s150 + $0x310] sm:$0xff] %v822
      %1034 = vst [vmem:[%s150 + $0x318] sm:$0xff] %v823
      %1035 = vst [vmem:[%s150 + $0x320] sm:$0xff] %v824
      %1036 = vst [vmem:[%s150 + $0x328] sm:$0xff] %v825
      %1037 = vst [vmem:[%s150 + $0x330] sm:$0xff] %v826
      %1038 = vst [vmem:[%s150 + $0x338] sm:$0xff] %v827
      %1039 = vst.msk [vmem:[%s150 + $0x340] sm:$0xff] %vm940, %v828
      %1040 = vst [vmem:[%s150 + $0x348] sm:$0xff] %v829
      %1041 = vst [vmem:[%s150 + $0x350] sm:$0xff] %v830
      %1042 = vst [vmem:[%s150 + $0x358] sm:$0xff] %v831
      %1043 = vst [vmem:[%s150 + $0x360] sm:$0xff] %v832
      %1044 = vst [vmem:[%s150 + $0x368] sm:$0xff] %v833
      %1045 = vst [vmem:[%s150 + $0x370] sm:$0xff] %v834
      %1046 = vst.msk [vmem:[%s150 + $0x378] sm:$0xff] %vm940, %v835
      %1047 = vst [vmem:[%s150 + $0x380] sm:$0xff] %v836
      %1048 = vst [vmem:[%s150 + $0x388] sm:$0xff] %v837
      %1049 = vst [vmem:[%s150 + $0x390] sm:$0xff] %v838
      %1050 = vst [vmem:[%s150 + $0x398] sm:$0xff] %v839
      %1051 = vst [vmem:[%s150 + $0x3a0] sm:$0xff] %v840
      %1052 = vst [vmem:[%s150 + $0x3a8] sm:$0xff] %v841
      %1053 = vst.msk [vmem:[%s150 + $0x3b0] sm:$0xff] %vm940, %v842
      %1054 = vst [vmem:[%s150 + $0x3b8] sm:$0xff] %v843
      %1055 = vst [vmem:[%s150 + $0x3c0] sm:$0xff] %v844
      %1056 = vst [vmem:[%s150 + $0x3c8] sm:$0xff] %v845
      %1057 = vst [vmem:[%s150 + $0x3d0] sm:$0xff] %v846
      %1058 = vst [vmem:[%s150 + $0x3d8] sm:$0xff] %v847
      %1059 = vst [vmem:[%s150 + $0x3e0] sm:$0xff] %v848
      %1060 = vst.msk [vmem:[%s150 + $0x3e8] sm:$0xff] %vm940, %v849
      %1061 = vst [vmem:[%s150 + $0x3f0] sm:$0xff] %v850
      %1062 = vst [vmem:[%s150 + $0x3f8] sm:$0xff] %v851
      %1063 = vst [vmem:[%s150 + $0x400] sm:$0xff] %v852
      %1064 = vst [vmem:[%s150 + $0x408] sm:$0xff] %v853
      %1065 = vst [vmem:[%s150 + $0x410] sm:$0xff] %v854
      %1066 = vst [vmem:[%s150 + $0x418] sm:$0xff] %v855
      %1067 = vst.msk [vmem:[%s150 + $0x420] sm:$0xff] %vm940, %v856
      %1068 = vst [vmem:[%s150 + $0x428] sm:$0xff] %v857
      %1069 = vst [vmem:[%s150 + $0x430] sm:$0xff] %v858
      %1070 = vst [vmem:[%s150 + $0x438] sm:$0xff] %v859
      %1071 = vst [vmem:[%s150 + $0x440] sm:$0xff] %v860
      %1072 = vst [vmem:[%s150 + $0x448] sm:$0xff] %v861
      %1073 = vst [vmem:[%s150 + $0x450] sm:$0xff] %v862
      %1074 = vst.msk [vmem:[%s150 + $0x458] sm:$0xff] %vm940, %v863
      %1075 = vst [vmem:[%s150 + $0x460] sm:$0xff] %v864
      %1076 = vst [vmem:[%s150 + $0x468] sm:$0xff] %v865
      %1077 = vst [vmem:[%s150 + $0x470] sm:$0xff] %v866
      %1078 = vst [vmem:[%s150 + $0x478] sm:$0xff] %v867
      %1079 = vst [vmem:[%s150 + $0x480] sm:$0xff] %v868
      %1080 = vst [vmem:[%s150 + $0x488] sm:$0xff] %v869
      %1081 = vst.msk [vmem:[%s150 + $0x490] sm:$0xff] %vm940, %v870
      %1082 = vst [vmem:[%s150 + $0x498] sm:$0xff] %v871
      %1083 = vst [vmem:[%s150 + $0x4a0] sm:$0xff] %v872
      %1084 = vst [vmem:[%s150 + $0x4a8] sm:$0xff] %v873
      %1085 = vst [vmem:[%s150 + $0x4b0] sm:$0xff] %v874
      %1086 = vst [vmem:[%s150 + $0x4b8] sm:$0xff] %v875
      %1087 = vst [vmem:[%s150 + $0x4c0] sm:$0xff] %v876
      %1088 = vst.msk [vmem:[%s150 + $0x4c8] sm:$0xff] %vm940, %v877
      %1089 = vst [vmem:[%s150 + $0x4d0] sm:$0xff] %v878
      %1090 = vst [vmem:[%s150 + $0x4d8] sm:$0xff] %v879
      %1091 = vst [vmem:[%s150 + $0x4e0] sm:$0xff] %v880
      %1092 = vst [vmem:[%s150 + $0x4e8] sm:$0xff] %v881
      %1093 = vst [vmem:[%s150 + $0x4f0] sm:$0xff] %v882
      %1094 = vst [vmem:[%s150 + $0x4f8] sm:$0xff] %v883
      %1095 = vst.msk [vmem:[%s150 + $0x500] sm:$0xff] %vm940, %v884
      %1096 = vst [vmem:[%s150 + $0x508] sm:$0xff] %v885
      %1097 = vst [vmem:[%s150 + $0x510] sm:$0xff] %v886
      %1098 = vst [vmem:[%s150 + $0x518] sm:$0xff] %v887
      %1099 = vst [vmem:[%s150 + $0x520] sm:$0xff] %v888
      %1100 = vst [vmem:[%s150 + $0x528] sm:$0xff] %v889
      %1101 = vst [vmem:[%s150 + $0x530] sm:$0xff] %v890
      %1102 = vst.msk [vmem:[%s150 + $0x538] sm:$0xff] %vm940, %v891
      %1103 = vst [vmem:[%s150 + $0x540] sm:$0xff] %v892
      %1104 = vst [vmem:[%s150 + $0x548] sm:$0xff] %v893
      %1105 = vst [vmem:[%s150 + $0x550] sm:$0xff] %v894
      %1106 = vst [vmem:[%s150 + $0x558] sm:$0xff] %v895
      %1107 = vst [vmem:[%s150 + $0x560] sm:$0xff] %v896
      %1108 = vst [vmem:[%s150 + $0x568] sm:$0xff] %v897
      %1109 = vst.msk [vmem:[%s150 + $0x570] sm:$0xff] %vm940, %v898
      %1110 = vst [vmem:[%s150 + $0x578] sm:$0xff] %v899
      %1111 = vst [vmem:[%s150 + $0x580] sm:$0xff] %v900
      %1112 = vst [vmem:[%s150 + $0x588] sm:$0xff] %v901
      %1113 = vst [vmem:[%s150 + $0x590] sm:$0xff] %v902
      %1114 = vst [vmem:[%s150 + $0x598] sm:$0xff] %v903
      %1115 = vst [vmem:[%s150 + $0x5a0] sm:$0xff] %v904
      %1116 = vst.msk [vmem:[%s150 + $0x5a8] sm:$0xff] %vm940, %v905
      %1117 = vst [vmem:[%s150 + $0x5b0] sm:$0xff] %v906
      %1118 = vst [vmem:[%s150 + $0x5b8] sm:$0xff] %v907
      %1119 = vst [vmem:[%s150 + $0x5c0] sm:$0xff] %v908
      %1120 = vst [vmem:[%s150 + $0x5c8] sm:$0xff] %v909
      %1121 = vst [vmem:[%s150 + $0x5d0] sm:$0xff] %v910
      %1122 = vst [vmem:[%s150 + $0x5d8] sm:$0xff] %v911
      %1123 = vst.msk [vmem:[%s150 + $0x5e0] sm:$0xff] %vm940, %v912
      %1124 = vst [vmem:[%s150 + $0x5e8] sm:$0xff] %v913
      %1125 = vst [vmem:[%s150 + $0x5f0] sm:$0xff] %v914
      %1126 = vst [vmem:[%s150 + $0x5f8] sm:$0xff] %v915
      %1127 = vst [vmem:[%s150 + $0x600] sm:$0xff] %v916
      %1128 = vst [vmem:[%s150 + $0x608] sm:$0xff] %v917
      %1129 = vst [vmem:[%s150 + $0x610] sm:$0xff] %v918
      %1130 = vst.msk [vmem:[%s150 + $0x618] sm:$0xff] %vm940, %v919
      %1131 = vst [vmem:[%s150 + $0x620] sm:$0xff] %v920
      %1132 = vst [vmem:[%s150 + $0x628] sm:$0xff] %v921
      %1133 = vst [vmem:[%s150 + $0x630] sm:$0xff] %v922
      %1134 = vst [vmem:[%s150 + $0x638] sm:$0xff] %v923
      %1135 = vst [vmem:[%s150 + $0x640] sm:$0xff] %v924
      %1136 = vst [vmem:[%s150 + $0x648] sm:$0xff] %v925
      %1137 = vst.msk [vmem:[%s150 + $0x650] sm:$0xff] %vm940, %v926
      %1138 = vst [vmem:[%s150 + $0x658] sm:$0xff] %v927
      %1139 = vst [vmem:[%s150 + $0x660] sm:$0xff] %v928
      %1140 = vst [vmem:[%s150 + $0x668] sm:$0xff] %v929
      %1141 = vst [vmem:[%s150 + $0x670] sm:$0xff] %v930
      %1142 = vst [vmem:[%s150 + $0x678] sm:$0xff] %v931
      %1143 = vst [vmem:[%s150 + $0x680] sm:$0xff] %v932
      %1144 = vst.msk [vmem:[%s150 + $0x688] sm:$0xff] %vm940, %v933
      %s1145 = smul.u32 30, %s13
      %p1146 = scmp.lt.s32.totalorder %s1145, 59
      %s1147 = scalar_select %p1146, %s1145, 59
      %s1148 = smul.addr %s1147, 7
      %s1149 = smul.addr %s1148, 8
      %s1150 = scalar_lea.vmem %s2, %s1149
      // Predicated region
      $region29: #{tpu_custom_call.1} parent=27 // pred_check
        %p1151 = pneg %p78
      $region30: #{tpu_custom_call.1} parent=27 // pred_check_branch
        %1153 = sbr.rel (%p1151) target = $region32
      $region31: #{tpu_custom_call.1} parent=27 // pred_region
        %s1154 = smul.u32 30, %s13
      $region32: #{tpu_custom_call.1} parent=27 // pred_fallthru
        _
    $region28: #{tpu_custom_call.1} parent=5 // pred_fallthru
      _
    %p1155 = scmp.le.s32.totalorder 2, %s8
    // Predicated region
    $region33: #{tpu_custom_call.1} parent=5 // pred_check
      %p1156 = pneg %p1155
    $region34: #{tpu_custom_call.1} parent=5 // pred_check_branch
      %1158 = sbr.rel (%p1156) target = $region36
    $region35: #{tpu_custom_call.1} parent=5 // pred_region
      %s1159 = ssub.s32 %s8, 2
      // Predicated region
      $region37: #{tpu_custom_call.1} parent=35 // pred_check
        %p1160 = pneg %p84
      $region38: #{tpu_custom_call.1} parent=35 // pred_check_branch
        %1162 = sbr.rel (%p1160) target = $region40
      $region39: #{tpu_custom_call.1} parent=35 // pred_region
        %s1163 = smul.u32 30, %s14
        %p1164 = scmp.lt.s32.totalorder %s1163, 59
        %s1165 = scalar_select %p1164, %s1163, 59
        %s1166 = smul.addr %s1165, 7
        %s1167 = smul.addr %s1166, 8
        %s1168 = scalar_lea.vmem %s2, %s1167
      $region40: #{tpu_custom_call.1} parent=35 // pred_fallthru
        _
    $region36: #{tpu_custom_call.1} parent=5 // pred_fallthru
      _
  $region6: #{tpu_custom_call.1} parent=0 // loop_footer
    %s12 = sadd.s32 1, %s8
  $region7: #{tpu_custom_call.1} parent=0 // loop_footer_branch
    %7 = sbr.rel target = $region3
  $region8: #{tpu_custom_call.1} parent=0 // loop_exit
    _

</llo_original>
